<compile_context>
chip_gen: v6e
topology: v6e:2x2x1
jax: 0.10.0
libtpu: 0.0.40
codegen_flags: <defaults>
</compile_context>

<pallas_src>
import jax
import jax.numpy as jnp
from jax.experimental import pallas as pl
from jax.experimental.pallas import tpu as pltpu

HIDDEN1_UNITS = 128
HIDDEN2_UNITS = 64
HIDDEN3_UNITS = 32
HIDDEN4_UNITS = 16

_LANE = 128                 # lane width; batch-tile granularity
_MAX_TILE_B = 2048          # max batch rows per grid step
_SPLIT_THRESHOLD = 1024     # batches >= this get >= 2 grid steps (v7x 2 TCs)
_VPU_K_THRESHOLD = 8        # contraction dims this small skip the MXU


def _snet_kernel(x_ref,
                 w1_ref, b1_ref,
                 w2_ref, b2_ref,
                 w3_ref, b3_ref,
                 w4_ref, b4_ref,
                 w5_ref, b5_ref,
                 o_ref):
    """One batch tile, feature-major: activations are [features, TB]."""
    x = x_ref[...].astype(jnp.float32)               # (in_dim, TB)
    in_dim = x_ref.shape[0]

    # ---- Layer 1 ----
    if in_dim <= _VPU_K_THRESHOLD:
        # Tiny contraction dim: VPU broadcast FMAs in fp32 (no empty MXU pass).
        w1 = w1_ref[...]                              # (H1, in_dim) fp32
        h = b1_ref[...] + w1[:, 0:1] * x[0:1, :]
        for k in range(1, in_dim):
            h = h + w1[:, k:k + 1] * x[k:k + 1, :]
    else:
        # fp32 MXU matmul so numerics match the fp32 reference for wide inputs.
        h = jnp.dot(w1_ref[...], x,
                    preferred_element_type=jnp.float32) + b1_ref[...]
    h = jnp.maximum(h, 0.0)

    # ---- Layers 2-4: bf16 MXU, fp32 accumulate; N = TB keeps lanes full ----
    for w_ref, b_ref in ((w2_ref, b2_ref), (w3_ref, b3_ref), (w4_ref, b4_ref)):
        h = jnp.dot(w_ref[...], h.astype(jnp.bfloat16),
                    preferred_element_type=jnp.float32) + b_ref[...]
        h = jnp.maximum(h, 0.0)

    # ---- Layer 5 (no activation); (out_size, TB) result is lane-dense ----
    h = jnp.dot(w5_ref[...], h.astype(jnp.bfloat16),
                preferred_element_type=jnp.float32) + b5_ref[...]
    o_ref[...] = h.astype(o_ref.dtype)


def _round_up(v, m):
    return ((v + m - 1) // m) * m


@jax.jit
def snet_forward(x, params):
    """x: [B, input_size] fp32; params: kernel-ready tuple from prepare_params."""
    w1, b1, w2, b2, w3, b3, w4, b4, w5, b5 = params
    batch, in_dim = x.shape
    out_size = w5.shape[0]

    # Batch-tile selection: multiple of 128 (lane-dense), minimal pad waste,
    # and >= 2 grid steps for large batches so both v7x TensorCores get work.
    n_tiles = max(1, -(-batch // _MAX_TILE_B))
    if n_tiles == 1 and batch >= _SPLIT_THRESHOLD:
        n_tiles = 2
    tb = min(_MAX_TILE_B, _round_up(-(-batch // n_tiles), _LANE))
    n_tiles = -(-batch // tb)
    b_pad = tb * n_tiles

    if b_pad != batch:
        x = jnp.pad(x, ((0, b_pad - batch), (0, 0)))
    xt = x.T                                          # (in_dim, b_pad)

    def resident(arr):
        # Full-array block, same block every step -> stays resident in VMEM.
        return pl.BlockSpec(arr.shape, lambda i: (0, 0))

    out_t = pl.pallas_call(
        _snet_kernel,
        out_shape=jax.ShapeDtypeStruct((out_size, b_pad), jnp.float32),
        grid=(n_tiles,),
        in_specs=[
            pl.BlockSpec((in_dim, tb), lambda i: (0, i)),   # x: batch on lanes
            resident(w1), resident(b1),
            resident(w2), resident(b2),
            resident(w3), resident(b3),
            resident(w4), resident(b4),
            resident(w5), resident(b5),
        ],
        out_specs=pl.BlockSpec((out_size, tb), lambda i: (0, i)),
        compiler_params=pltpu.CompilerParams(
            dimension_semantics=("parallel",),
            vmem_limit_bytes=32 * 1024 * 1024,
        ),
    )(xt, w1, b1, w2, b2, w3, b3, w4, b4, w5, b5)

    return out_t[:, :batch].T                         # [B, out_size]


def init_params(key, input_size, output_size):
    """PyTorch-style init: W ~ U(-1/sqrt(fan_in), 1/sqrt(fan_in)), shape [out, in]."""
    sizes = [input_size, HIDDEN1_UNITS, HIDDEN2_UNITS, HIDDEN3_UNITS,
             HIDDEN4_UNITS, output_size]
    params = []
    for i in range(5):
        fan_in, fan_out = sizes[i], sizes[i + 1]
        key, kw, kb = jax.random.split(key, 3)
        bound = 1.0 / (fan_in ** 0.5)
        w = jax.random.uniform(kw, (fan_out, fan_in), jnp.float32, -bound, bound)
        b = jax.random.uniform(kb, (fan_out,), jnp.float32, -bound, bound)
        params += [w, b]
    return tuple(params)


def prepare_params(params):
    """One-time conversion to the kernel layout.

    Weights stay [out_f, in_f]; layer-1 weight stays fp32 (VPU path), layers
    2-5 are cast to bf16 ONCE here (not per forward call); biases become
    [out_f, 1] fp32 so they broadcast over the lane (batch) axis.
    """
    w1, b1, w2, b2, w3, b3, w4, b4, w5, b5 = params
    return (
        w1, b1.reshape(-1, 1),
        w2.astype(jnp.bfloat16), b2.reshape(-1, 1),
        w3.astype(jnp.bfloat16), b3.reshape(-1, 1),
        w4.astype(jnp.bfloat16), b4.reshape(-1, 1),
        w5.astype(jnp.bfloat16), b5.reshape(-1, 1),
    )


def _reference_forward(x, kparams):
    """Pure-JAX reference matching the kernel numerics (fp32 L1, bf16 MXU L2-5)."""
    w1, b1, w2, b2, w3, b3, w4, b4, w5, b5 = kparams
    h = jnp.maximum(jnp.dot(w1, x.T) + b1, 0.0)
    for w, b in ((w2, b2), (w3, b3), (w4, b4)):
        h = jnp.maximum(
            jnp.dot(w, h.astype(jnp.bfloat16),
                    preferred_element_type=jnp.float32) + b, 0.0)
    h = jnp.dot(w5, h.astype(jnp.bfloat16),
                preferred_element_type=jnp.float32) + b5
    return h.T


if __name__ == "__main__":
    # Mishra bird / eggholder test functions: 2-D input, scalar output.
    INPUT_SIZE = 2
    OUTPUT_SIZE = 1
    BATCH = 8

    key = jax.random.PRNGKey(0)
    key, kx = jax.random.split(key)
    x = jax.random.normal(kx, (BATCH, INPUT_SIZE), dtype=jnp.float32)

    params = init_params(key, INPUT_SIZE, OUTPUT_SIZE)
    kparams = prepare_params(params)          # bf16 casts happen once, here

    out = snet_forward(x, kparams)
    out = jax.block_until_ready(out)

    ref = _reference_forward(x, kparams)
    assert out.shape == (BATCH, OUTPUT_SIZE), out.shape
    assert jnp.allclose(out, ref, atol=1e-3, rtol=1e-3), "mismatch vs JAX reference"

    print("KERNEL_OK")
</pallas_src>

<mosaic_0001>
module attributes {stable_mosaic.version = 11 : i64} {
  func.func @_snet_kernel(%arg0: i32, %arg1: memref<2x128xf32, #tpu.memory_space<vmem>>, %arg2: memref<128x2xf32, #tpu.memory_space<vmem>>, %arg3: memref<128x1xf32, #tpu.memory_space<vmem>>, %arg4: memref<64x128xbf16, #tpu.memory_space<vmem>>, %arg5: memref<64x1xf32, #tpu.memory_space<vmem>>, %arg6: memref<32x64xbf16, #tpu.memory_space<vmem>>, %arg7: memref<32x1xf32, #tpu.memory_space<vmem>>, %arg8: memref<16x32xbf16, #tpu.memory_space<vmem>>, %arg9: memref<16x1xf32, #tpu.memory_space<vmem>>, %arg10: memref<1x16xbf16, #tpu.memory_space<vmem>>, %arg11: memref<1x1xf32, #tpu.memory_space<vmem>>, %arg12: memref<1x128xf32, #tpu.memory_space<vmem>>) attributes {dimension_semantics = [#tpu.dimension_semantics<parallel>], iteration_bounds = array<i64: 1>, scalar_prefetch = 0 : i64, scratch_operands = 0 : i64, tpu.core_type = #tpu.core_type<tc>, window_params = [{transform_indices = @transform_0, window_bounds = array<i64: 2, 128>}, {pipeline_mode = #tpu.pipeline_mode<synchronous>, transform_indices = @transform_1, window_bounds = array<i64: 128, 2>}, {pipeline_mode = #tpu.pipeline_mode<synchronous>, transform_indices = @transform_2, window_bounds = array<i64: 128, 1>}, {pipeline_mode = #tpu.pipeline_mode<synchronous>, transform_indices = @transform_3, window_bounds = array<i64: 64, 128>}, {pipeline_mode = #tpu.pipeline_mode<synchronous>, transform_indices = @transform_4, window_bounds = array<i64: 64, 1>}, {pipeline_mode = #tpu.pipeline_mode<synchronous>, transform_indices = @transform_5, window_bounds = array<i64: 32, 64>}, {pipeline_mode = #tpu.pipeline_mode<synchronous>, transform_indices = @transform_6, window_bounds = array<i64: 32, 1>}, {pipeline_mode = #tpu.pipeline_mode<synchronous>, transform_indices = @transform_7, window_bounds = array<i64: 16, 32>}, {pipeline_mode = #tpu.pipeline_mode<synchronous>, transform_indices = @transform_8, window_bounds = array<i64: 16, 1>}, {pipeline_mode = #tpu.pipeline_mode<synchronous>, transform_indices = @transform_9, window_bounds = array<i64: 1, 16>}, {pipeline_mode = #tpu.pipeline_mode<synchronous>, transform_indices = @transform_10, window_bounds = array<i64: 1, 1>}, {transform_indices = @transform_11, window_bounds = array<i64: 1, 128>}]} {
    %c0 = arith.constant 0 : index
    %c0_0 = arith.constant 0 : index
    %0 = vector.load %arg1[%c0, %c0_0] : memref<2x128xf32, #tpu.memory_space<vmem>>, vector<2x128xf32>
    %c0_1 = arith.constant 0 : index
    %c0_2 = arith.constant 0 : index
    %1 = vector.load %arg2[%c0_1, %c0_2] : memref<128x2xf32, #tpu.memory_space<vmem>>, vector<128x2xf32>
    %c0_3 = arith.constant 0 : index
    %c0_4 = arith.constant 0 : index
    %2 = vector.load %arg3[%c0_3, %c0_4] : memref<128x1xf32, #tpu.memory_space<vmem>>, vector<128x1xf32>
    %3 = vector.extract_strided_slice %1 {offsets = [0, 0], sizes = [128, 1], strides = [1, 1]} : vector<128x2xf32> to vector<128x1xf32>
    %4 = vector.extract_strided_slice %0 {offsets = [0, 0], sizes = [1, 128], strides = [1, 1]} : vector<2x128xf32> to vector<1x128xf32>
    %5 = vector.broadcast %3 : vector<128x1xf32> to vector<128x128xf32>
    %6 = vector.broadcast %4 : vector<1x128xf32> to vector<128x128xf32>
    %7 = arith.mulf %5, %6 : vector<128x128xf32>
    %8 = vector.broadcast %2 : vector<128x1xf32> to vector<128x128xf32>
    %9 = arith.addf %8, %7 : vector<128x128xf32>
    %10 = vector.extract_strided_slice %1 {offsets = [0, 1], sizes = [128, 1], strides = [1, 1]} : vector<128x2xf32> to vector<128x1xf32>
    %11 = vector.extract_strided_slice %0 {offsets = [1, 0], sizes = [1, 128], strides = [1, 1]} : vector<2x128xf32> to vector<1x128xf32>
    %12 = vector.broadcast %10 : vector<128x1xf32> to vector<128x128xf32>
    %13 = vector.broadcast %11 : vector<1x128xf32> to vector<128x128xf32>
    %14 = arith.mulf %12, %13 : vector<128x128xf32>
    %15 = arith.addf %9, %14 : vector<128x128xf32>
    %cst = arith.constant 0.000000e+00 : f32
    %16 = vector.broadcast %cst : f32 to vector<128x128xf32>
    %17 = arith.maximumf %15, %16 : vector<128x128xf32>
    %c0_5 = arith.constant 0 : index
    %c0_6 = arith.constant 0 : index
    %18 = vector.load %arg4[%c0_5, %c0_6] : memref<64x128xbf16, #tpu.memory_space<vmem>>, vector<64x128xbf16>
    %19 = arith.truncf %17 : vector<128x128xf32> to vector<128x128xbf16>
    %cst_7 = arith.constant dense<0.000000e+00> : vector<64x128xf32>
    %20 = tpu.matmul %18, %19, %cst_7 {dimension_numbers = #tpu.dot_dimension_numbers<[1], [0], [0], [1], [0, 0, 1, 1], [], []>} : vector<64x128xbf16>, vector<128x128xbf16>, vector<64x128xf32> -> vector<64x128xf32>
    %c0_8 = arith.constant 0 : index
    %c0_9 = arith.constant 0 : index
    %21 = vector.load %arg5[%c0_8, %c0_9] : memref<64x1xf32, #tpu.memory_space<vmem>>, vector<64x1xf32>
    %22 = vector.broadcast %21 : vector<64x1xf32> to vector<64x128xf32>
    %23 = arith.addf %20, %22 : vector<64x128xf32>
    %cst_10 = arith.constant 0.000000e+00 : f32
    %24 = vector.broadcast %cst_10 : f32 to vector<64x128xf32>
    %25 = arith.maximumf %23, %24 : vector<64x128xf32>
    %c0_11 = arith.constant 0 : index
    %c0_12 = arith.constant 0 : index
    %26 = vector.load %arg6[%c0_11, %c0_12] : memref<32x64xbf16, #tpu.memory_space<vmem>>, vector<32x64xbf16>
    %27 = arith.truncf %25 : vector<64x128xf32> to vector<64x128xbf16>
    %cst_13 = arith.constant dense<0.000000e+00> : vector<32x128xf32>
    %28 = tpu.matmul %26, %27, %cst_13 {dimension_numbers = #tpu.dot_dimension_numbers<[1], [0], [0], [1], [0, 0, 1, 1], [], []>} : vector<32x64xbf16>, vector<64x128xbf16>, vector<32x128xf32> -> vector<32x128xf32>
    %c0_14 = arith.constant 0 : index
    %c0_15 = arith.constant 0 : index
    %29 = vector.load %arg7[%c0_14, %c0_15] : memref<32x1xf32, #tpu.memory_space<vmem>>, vector<32x1xf32>
    %30 = vector.broadcast %29 : vector<32x1xf32> to vector<32x128xf32>
    %31 = arith.addf %28, %30 : vector<32x128xf32>
    %cst_16 = arith.constant 0.000000e+00 : f32
    %32 = vector.broadcast %cst_16 : f32 to vector<32x128xf32>
    %33 = arith.maximumf %31, %32 : vector<32x128xf32>
    %c0_17 = arith.constant 0 : index
    %c0_18 = arith.constant 0 : index
    %34 = vector.load %arg8[%c0_17, %c0_18] : memref<16x32xbf16, #tpu.memory_space<vmem>>, vector<16x32xbf16>
    %35 = arith.truncf %33 : vector<32x128xf32> to vector<32x128xbf16>
    %cst_19 = arith.constant dense<0.000000e+00> : vector<16x128xf32>
    %36 = tpu.matmul %34, %35, %cst_19 {dimension_numbers = #tpu.dot_dimension_numbers<[1], [0], [0], [1], [0, 0, 1, 1], [], []>} : vector<16x32xbf16>, vector<32x128xbf16>, vector<16x128xf32> -> vector<16x128xf32>
    %c0_20 = arith.constant 0 : index
    %c0_21 = arith.constant 0 : index
    %37 = vector.load %arg9[%c0_20, %c0_21] : memref<16x1xf32, #tpu.memory_space<vmem>>, vector<16x1xf32>
    %38 = vector.broadcast %37 : vector<16x1xf32> to vector<16x128xf32>
    %39 = arith.addf %36, %38 : vector<16x128xf32>
    %cst_22 = arith.constant 0.000000e+00 : f32
    %40 = vector.broadcast %cst_22 : f32 to vector<16x128xf32>
    %41 = arith.maximumf %39, %40 : vector<16x128xf32>
    %c0_23 = arith.constant 0 : index
    %c0_24 = arith.constant 0 : index
    %42 = vector.load %arg10[%c0_23, %c0_24] : memref<1x16xbf16, #tpu.memory_space<vmem>>, vector<1x16xbf16>
    %43 = arith.truncf %41 : vector<16x128xf32> to vector<16x128xbf16>
    %cst_25 = arith.constant dense<0.000000e+00> : vector<1x128xf32>
    %44 = tpu.matmul %42, %43, %cst_25 {dimension_numbers = #tpu.dot_dimension_numbers<[1], [0], [0], [1], [0, 0, 1, 1], [], []>} : vector<1x16xbf16>, vector<16x128xbf16>, vector<1x128xf32> -> vector<1x128xf32>
    %c0_26 = arith.constant 0 : index
    %c0_27 = arith.constant 0 : index
    %45 = vector.load %arg11[%c0_26, %c0_27] : memref<1x1xf32, #tpu.memory_space<vmem>>, vector<1x1xf32>
    %46 = vector.broadcast %45 : vector<1x1xf32> to vector<1x128xf32>
    %47 = arith.addf %44, %46 : vector<1x128xf32>
    %c0_28 = arith.constant 0 : index
    %c0_29 = arith.constant 0 : index
    %48 = vector.load %arg12[%c0_28, %c0_29] : memref<1x128xf32, #tpu.memory_space<vmem>>, vector<1x128xf32>
    tpu.vector_store %arg12[%c0_28, %c0_29], %47 {strides = array<i32>} : memref<1x128xf32, #tpu.memory_space<vmem>>, vector<1x128xf32>,
    return
  }
  func.func @transform_0(%arg0: i32) -> (i32, i32) {
    %c0_i32 = arith.constant 0 : i32
    %c0_i32_0 = arith.constant 0 : i32
    return %c0_i32, %arg0 : i32, i32
  }
  func.func @transform_1(%arg0: i32) -> (i32, i32) {
    %c0_i32 = arith.constant 0 : i32
    %c0_i32_0 = arith.constant 0 : i32
    %c0_i32_1 = arith.constant 0 : i32
    return %c0_i32, %c0_i32_0 : i32, i32
  }
  func.func @transform_2(%arg0: i32) -> (i32, i32) {
    %c0_i32 = arith.constant 0 : i32
    %c0_i32_0 = arith.constant 0 : i32
    %c0_i32_1 = arith.constant 0 : i32
    return %c0_i32, %c0_i32_0 : i32, i32
  }
  func.func @transform_3(%arg0: i32) -> (i32, i32) {
    %c0_i32 = arith.constant 0 : i32
    %c0_i32_0 = arith.constant 0 : i32
    %c0_i32_1 = arith.constant 0 : i32
    return %c0_i32, %c0_i32_0 : i32, i32
  }
  func.func @transform_4(%arg0: i32) -> (i32, i32) {
    %c0_i32 = arith.constant 0 : i32
    %c0_i32_0 = arith.constant 0 : i32
    %c0_i32_1 = arith.constant 0 : i32
    return %c0_i32, %c0_i32_0 : i32, i32
  }
  func.func @transform_5(%arg0: i32) -> (i32, i32) {
    %c0_i32 = arith.constant 0 : i32
    %c0_i32_0 = arith.constant 0 : i32
    %c0_i32_1 = arith.constant 0 : i32
    return %c0_i32, %c0_i32_0 : i32, i32
  }
  func.func @transform_6(%arg0: i32) -> (i32, i32) {
    %c0_i32 = arith.constant 0 : i32
    %c0_i32_0 = arith.constant 0 : i32
    %c0_i32_1 = arith.constant 0 : i32
    return %c0_i32, %c0_i32_0 : i32, i32
  }
  func.func @transform_7(%arg0: i32) -> (i32, i32) {
    %c0_i32 = arith.constant 0 : i32
    %c0_i32_0 = arith.constant 0 : i32
    %c0_i32_1 = arith.constant 0 : i32
    return %c0_i32, %c0_i32_0 : i32, i32
  }
  func.func @transform_8(%arg0: i32) -> (i32, i32) {
    %c0_i32 = arith.constant 0 : i32
    %c0_i32_0 = arith.constant 0 : i32
    %c0_i32_1 = arith.constant 0 : i32
    return %c0_i32, %c0_i32_0 : i32, i32
  }
  func.func @transform_9(%arg0: i32) -> (i32, i32) {
    %c0_i32 = arith.constant 0 : i32
    %c0_i32_0 = arith.constant 0 : i32
    %c0_i32_1 = arith.constant 0 : i32
    return %c0_i32, %c0_i32_0 : i32, i32
  }
  func.func @transform_10(%arg0: i32) -> (i32, i32) {
    %c0_i32 = arith.constant 0 : i32
    %c0_i32_0 = arith.constant 0 : i32
    %c0_i32_1 = arith.constant 0 : i32
    return %c0_i32, %c0_i32_0 : i32, i32
  }
  func.func @transform_11(%arg0: i32) -> (i32, i32) {
    %c0_i32 = arith.constant 0 : i32
    %c0_i32_0 = arith.constant 0 : i32
    return %c0_i32, %arg0 : i32, i32
  }
}

</mosaic_0001>

<llo_original>
// kernel: snet_forward.1
$region0: #{snet_forward.1}
  #allocation0 [shape = 'u32[]', space=smem, size = 0x4, offset = 0x4, fixed_abs, tag = 'smem constant byte address 0x4 - core index']
  #allocation1 [shape = 'u32[144,128]{1,0:T(1,128)}', space=vmem, size = 0x12000, scoped, tag = 'internal scratch']
  #allocation2 [shape = 'f32[1,1]{1,0:T(1,128)S(1)}', space=vmem, size = 0x200, scoped, tag = 'scoped memory for snet_forward.1']
  %s0 = inlined_call_operand.vmem [shape: f32[2,128], index: 0, kind: input, shape index: {}]
  %s1 = inlined_call_operand.vmem [shape: f32[128,2], index: 1, kind: input, shape index: {}]
  %s2 = inlined_call_operand.vmem [shape: f32[128,1], index: 2, kind: input, shape index: {}]
  %s3 = inlined_call_operand.vmem [shape: bf16[64,128], index: 3, kind: input, shape index: {}]
  %s4 = inlined_call_operand.vmem [shape: f32[64,1], index: 4, kind: input, shape index: {}]
  %s5 = inlined_call_operand.vmem [shape: bf16[32,64], index: 5, kind: input, shape index: {}]
  %s6 = inlined_call_operand.vmem [shape: f32[32,1], index: 6, kind: input, shape index: {}]
  %s7 = inlined_call_operand.vmem [shape: bf16[16,32], index: 7, kind: input, shape index: {}]
  %s8 = inlined_call_operand.vmem [shape: f32[16,1], index: 8, kind: input, shape index: {}]
  %s9 = inlined_call_operand.vmem [shape: bf16[1,16], index: 9, kind: input, shape index: {}]
  %s10 = inlined_call_operand.<no memory space> [shape: f32[1,1], index: 10, kind: input, shape index: {}]
  %s11 = inlined_call_operand.vmem [shape: f32[1,128], index: 11, kind: output, shape index: {}]
  %s12 = sld [smem:[#allocation0]]
  $region54: #{snet_forward.1} parent=0
    _
  %s14 = ssub.s32 1, %s12
  %s15 = scalar_select 0, %s14, %s12
  %v16 = vstv %s10
  %17 = vst [vmem:[#allocation2] sm:$0x1] %v16
  // Predicated region
  $region2: #{snet_forward.1} parent=0 // pred_check
    _
  $region3: #{snet_forward.1} parent=0 // pred_check_branch
    %19 = sbr.rel (0) target = $region5
  $region4: #{snet_forward.1} parent=0 // pred_region
    _
  $region5: #{snet_forward.1} parent=0 // pred_fallthru
    _
  // Predicated region
  $region6: #{snet_forward.1} parent=0 // pred_check
    _
  $region7: #{snet_forward.1} parent=0 // pred_check_branch
    %21 = sbr.rel (0) target = $region9
  $region8: #{snet_forward.1} parent=0 // pred_region
    _
  $region9: #{snet_forward.1} parent=0 // pred_fallthru
    _
  // Predicated region
  $region10: #{snet_forward.1} parent=0 // pred_check
    _
  $region11: #{snet_forward.1} parent=0 // pred_check_branch
    %23 = sbr.rel (0) target = $region13
  $region12: #{snet_forward.1} parent=0 // pred_region
    _
  $region13: #{snet_forward.1} parent=0 // pred_fallthru
    _
  // Predicated region
  $region14: #{snet_forward.1} parent=0 // pred_check
    _
  $region15: #{snet_forward.1} parent=0 // pred_check_branch
    %25 = sbr.rel (0) target = $region17
  $region16: #{snet_forward.1} parent=0 // pred_region
    _
  $region17: #{snet_forward.1} parent=0 // pred_fallthru
    _
  // Predicated region
  $region18: #{snet_forward.1} parent=0 // pred_check
    _
  $region19: #{snet_forward.1} parent=0 // pred_check_branch
    %27 = sbr.rel (0) target = $region21
  $region20: #{snet_forward.1} parent=0 // pred_region
    _
  $region21: #{snet_forward.1} parent=0 // pred_fallthru
    _
  // Predicated region
  $region22: #{snet_forward.1} parent=0 // pred_check
    _
  $region23: #{snet_forward.1} parent=0 // pred_check_branch
    %29 = sbr.rel (0) target = $region25
  $region24: #{snet_forward.1} parent=0 // pred_region
    _
  $region25: #{snet_forward.1} parent=0 // pred_fallthru
    _
  // Predicated region
  $region26: #{snet_forward.1} parent=0 // pred_check
    _
  $region27: #{snet_forward.1} parent=0 // pred_check_branch
    %31 = sbr.rel (0) target = $region29
  $region28: #{snet_forward.1} parent=0 // pred_region
    _
  $region29: #{snet_forward.1} parent=0 // pred_fallthru
    _
  // Predicated region
  $region30: #{snet_forward.1} parent=0 // pred_check
    _
  $region31: #{snet_forward.1} parent=0 // pred_check_branch
    %33 = sbr.rel (0) target = $region33
  $region32: #{snet_forward.1} parent=0 // pred_region
    _
  $region33: #{snet_forward.1} parent=0 // pred_fallthru
    _
  // Predicated region
  $region34: #{snet_forward.1} parent=0 // pred_check
    _
  $region35: #{snet_forward.1} parent=0 // pred_check_branch
    %35 = sbr.rel (0) target = $region37
  $region36: #{snet_forward.1} parent=0 // pred_region
    _
  $region37: #{snet_forward.1} parent=0 // pred_fallthru
    _
  // Predicated region
  $region38: #{snet_forward.1} parent=0 // pred_check
    _
  $region39: #{snet_forward.1} parent=0 // pred_check_branch
    %37 = sbr.rel (0) target = $region41
  $region40: #{snet_forward.1} parent=0 // pred_region
    _
  $region41: #{snet_forward.1} parent=0 // pred_fallthru
    _
  // Predicated region
  $region42: #{snet_forward.1} parent=0 // pred_check
    _
  $region43: #{snet_forward.1} parent=0 // pred_check_branch
    %39 = sbr.rel (0) target = $region45
  $region44: #{snet_forward.1} parent=0 // pred_region
    _
  $region45: #{snet_forward.1} parent=0 // pred_fallthru
    _
  %v41 = vld [vmem:[%s0] sm:$0x3]
  %v42 = vld [vmem:[%s1] sm:$0xff]
  %v43 = vld [vmem:[%s1 + $0x8] sm:$0xff]
  %v44 = vld [vmem:[%s1 + $0x10] sm:$0xff]
  %v45 = vld [vmem:[%s1 + $0x18] sm:$0xff]
  %v46 = vld [vmem:[%s1 + $0x20] sm:$0xff]
  %v47 = vld [vmem:[%s1 + $0x28] sm:$0xff]
  %v48 = vld [vmem:[%s1 + $0x30] sm:$0xff]
  %v49 = vld [vmem:[%s1 + $0x38] sm:$0xff]
  %v50 = vld [vmem:[%s1 + $0x40] sm:$0xff]
  %v51 = vld [vmem:[%s1 + $0x48] sm:$0xff]
  %v52 = vld [vmem:[%s1 + $0x50] sm:$0xff]
  %v53 = vld [vmem:[%s1 + $0x58] sm:$0xff]
  %v54 = vld [vmem:[%s1 + $0x60] sm:$0xff]
  %v55 = vld [vmem:[%s1 + $0x68] sm:$0xff]
  %v56 = vld [vmem:[%s1 + $0x70] sm:$0xff]
  %v57 = vld [vmem:[%s1 + $0x78] sm:$0xff]
  %v58 = vld [vmem:[%s2] sm:$0xff]
  %v59 = vld [vmem:[%s2 + $0x8] sm:$0xff]
  %v60 = vld [vmem:[%s2 + $0x10] sm:$0xff]
  %v61 = vld [vmem:[%s2 + $0x18] sm:$0xff]
  %v62 = vld [vmem:[%s2 + $0x20] sm:$0xff]
  %v63 = vld [vmem:[%s2 + $0x28] sm:$0xff]
  %v64 = vld [vmem:[%s2 + $0x30] sm:$0xff]
  %v65 = vld [vmem:[%s2 + $0x38] sm:$0xff]
  %v66 = vld [vmem:[%s2 + $0x40] sm:$0xff]
  %v67 = vld [vmem:[%s2 + $0x48] sm:$0xff]
  %v68 = vld [vmem:[%s2 + $0x50] sm:$0xff]
  %v69 = vld [vmem:[%s2 + $0x58] sm:$0xff]
  %v70 = vld [vmem:[%s2 + $0x60] sm:$0xff]
  %v71 = vld [vmem:[%s2 + $0x68] sm:$0xff]
  %v72 = vld [vmem:[%s2 + $0x70] sm:$0xff]
  %v73 = vld [vmem:[%s2 + $0x78] sm:$0xff]
  %75 = vset.pattern.permute.xlu0 0
  %76 = vperm.xlu0 %75, %v42
  %v77 = vpop.permute.xlu0 %76
  %80 = vset.pattern.permute.xlu0 0
  %81 = vperm.xlu0 %80, %v43
  %v82 = vpop.permute.xlu0 %81
  %85 = vset.pattern.permute.xlu0 0
  %86 = vperm.xlu0 %85, %v44
  %v87 = vpop.permute.xlu0 %86
  %90 = vset.pattern.permute.xlu0 0
  %91 = vperm.xlu0 %90, %v45
  %v92 = vpop.permute.xlu0 %91
  %95 = vset.pattern.permute.xlu0 0
  %96 = vperm.xlu0 %95, %v46
  %v97 = vpop.permute.xlu0 %96
  %100 = vset.pattern.permute.xlu0 0
  %101 = vperm.xlu0 %100, %v47
  %v102 = vpop.permute.xlu0 %101
  %105 = vset.pattern.permute.xlu0 0
  %106 = vperm.xlu0 %105, %v48
  %v107 = vpop.permute.xlu0 %106
  %110 = vset.pattern.permute.xlu0 0
  %111 = vperm.xlu0 %110, %v49
  %v112 = vpop.permute.xlu0 %111
  %115 = vset.pattern.permute.xlu0 0
  %116 = vperm.xlu0 %115, %v50
  %v117 = vpop.permute.xlu0 %116
  %120 = vset.pattern.permute.xlu0 0
  %121 = vperm.xlu0 %120, %v51
  %v122 = vpop.permute.xlu0 %121
  %125 = vset.pattern.permute.xlu0 0
  %126 = vperm.xlu0 %125, %v52
  %v127 = vpop.permute.xlu0 %126
  %130 = vset.pattern.permute.xlu0 0
  %131 = vperm.xlu0 %130, %v53
  %v132 = vpop.permute.xlu0 %131
  %135 = vset.pattern.permute.xlu0 0
  %136 = vperm.xlu0 %135, %v54
  %v137 = vpop.permute.xlu0 %136
  %140 = vset.pattern.permute.xlu0 0
  %141 = vperm.xlu0 %140, %v55
  %v142 = vpop.permute.xlu0 %141
  %145 = vset.pattern.permute.xlu0 0
  %146 = vperm.xlu0 %145, %v56
  %v147 = vpop.permute.xlu0 %146
  %150 = vset.pattern.permute.xlu0 0
  %151 = vperm.xlu0 %150, %v57
  %v152 = vpop.permute.xlu0 %151
  %v154 = vlaneseq
  %v155 = vshrl.u32 %v154, 7
  %v156 = vsub.s32 0, %v155
  %v157 = vrot.slane %v41, %v156
  %v158 = vmul.f32 %v77, %v157
  %v159 = vmul.f32 %v82, %v157
  %v160 = vmul.f32 %v87, %v157
  %v161 = vmul.f32 %v92, %v157
  %v162 = vmul.f32 %v97, %v157
  %v163 = vmul.f32 %v102, %v157
  %v164 = vmul.f32 %v107, %v157
  %v165 = vmul.f32 %v112, %v157
  %v166 = vmul.f32 %v117, %v157
  %v167 = vmul.f32 %v122, %v157
  %v168 = vmul.f32 %v127, %v157
  %v169 = vmul.f32 %v132, %v157
  %v170 = vmul.f32 %v137, %v157
  %v171 = vmul.f32 %v142, %v157
  %v172 = vmul.f32 %v147, %v157
  %v173 = vmul.f32 %v152, %v157
  %175 = vset.pattern.permute.xlu0 0
  %176 = vperm.xlu0 %175, %v58
  %v177 = vpop.permute.xlu0 %176
  %180 = vset.pattern.permute.xlu0 0
  %181 = vperm.xlu0 %180, %v59
  %v182 = vpop.permute.xlu0 %181
  %185 = vset.pattern.permute.xlu0 0
  %186 = vperm.xlu0 %185, %v60
  %v187 = vpop.permute.xlu0 %186
  %190 = vset.pattern.permute.xlu0 0
  %191 = vperm.xlu0 %190, %v61
  %v192 = vpop.permute.xlu0 %191
  %195 = vset.pattern.permute.xlu0 0
  %196 = vperm.xlu0 %195, %v62
  %v197 = vpop.permute.xlu0 %196
  %200 = vset.pattern.permute.xlu0 0
  %201 = vperm.xlu0 %200, %v63
  %v202 = vpop.permute.xlu0 %201
  %205 = vset.pattern.permute.xlu0 0
  %206 = vperm.xlu0 %205, %v64
  %v207 = vpop.permute.xlu0 %206
  %210 = vset.pattern.permute.xlu0 0
  %211 = vperm.xlu0 %210, %v65
  %v212 = vpop.permute.xlu0 %211
  %215 = vset.pattern.permute.xlu0 0
  %216 = vperm.xlu0 %215, %v66
  %v217 = vpop.permute.xlu0 %216
  %220 = vset.pattern.permute.xlu0 0
  %221 = vperm.xlu0 %220, %v67
  %v222 = vpop.permute.xlu0 %221
  %225 = vset.pattern.permute.xlu0 0
  %226 = vperm.xlu0 %225, %v68
  %v227 = vpop.permute.xlu0 %226
  %230 = vset.pattern.permute.xlu0 0
  %231 = vperm.xlu0 %230, %v69
  %v232 = vpop.permute.xlu0 %231
  %235 = vset.pattern.permute.xlu0 0
  %236 = vperm.xlu0 %235, %v70
  %v237 = vpop.permute.xlu0 %236
  %240 = vset.pattern.permute.xlu0 0
  %241 = vperm.xlu0 %240, %v71
  %v242 = vpop.permute.xlu0 %241
  %245 = vset.pattern.permute.xlu0 0
  %246 = vperm.xlu0 %245, %v72
  %v247 = vpop.permute.xlu0 %246
  %250 = vset.pattern.permute.xlu0 0
  %251 = vperm.xlu0 %250, %v73
  %v252 = vpop.permute.xlu0 %251
  %v254 = vadd.f32 %v177, %v158
  %v255 = vadd.f32 %v182, %v159
  %v256 = vadd.f32 %v187, %v160
  %v257 = vadd.f32 %v192, %v161
  %v258 = vadd.f32 %v197, %v162
  %v259 = vadd.f32 %v202, %v163
  %v260 = vadd.f32 %v207, %v164
  %v261 = vadd.f32 %v212, %v165
  %v262 = vadd.f32 %v217, %v166
  %v263 = vadd.f32 %v222, %v167
  %v264 = vadd.f32 %v227, %v168
  %v265 = vadd.f32 %v232, %v169
  %v266 = vadd.f32 %v237, %v170
  %v267 = vadd.f32 %v242, %v171
  %v268 = vadd.f32 %v247, %v172
  %v269 = vadd.f32 %v252, %v173
  %270 = vset.pattern.permute.xlu0 1
  %271 = vperm.xlu0 %270, %v42
  %v272 = vpop.permute.xlu0 %271
  %274 = vset.pattern.permute.xlu0 1
  %275 = vperm.xlu0 %274, %v43
  %v276 = vpop.permute.xlu0 %275
  %278 = vset.pattern.permute.xlu0 1
  %279 = vperm.xlu0 %278, %v44
  %v280 = vpop.permute.xlu0 %279
  %282 = vset.pattern.permute.xlu0 1
  %283 = vperm.xlu0 %282, %v45
  %v284 = vpop.permute.xlu0 %283
  %286 = vset.pattern.permute.xlu0 1
  %287 = vperm.xlu0 %286, %v46
  %v288 = vpop.permute.xlu0 %287
  %290 = vset.pattern.permute.xlu0 1
  %291 = vperm.xlu0 %290, %v47
  %v292 = vpop.permute.xlu0 %291
  %294 = vset.pattern.permute.xlu0 1
  %295 = vperm.xlu0 %294, %v48
  %v296 = vpop.permute.xlu0 %295
  %298 = vset.pattern.permute.xlu0 1
  %299 = vperm.xlu0 %298, %v49
  %v300 = vpop.permute.xlu0 %299
  %302 = vset.pattern.permute.xlu0 1
  %303 = vperm.xlu0 %302, %v50
  %v304 = vpop.permute.xlu0 %303
  %306 = vset.pattern.permute.xlu0 1
  %307 = vperm.xlu0 %306, %v51
  %v308 = vpop.permute.xlu0 %307
  %310 = vset.pattern.permute.xlu0 1
  %311 = vperm.xlu0 %310, %v52
  %v312 = vpop.permute.xlu0 %311
  %314 = vset.pattern.permute.xlu0 1
  %315 = vperm.xlu0 %314, %v53
  %v316 = vpop.permute.xlu0 %315
  %318 = vset.pattern.permute.xlu0 1
  %319 = vperm.xlu0 %318, %v54
  %v320 = vpop.permute.xlu0 %319
  %322 = vset.pattern.permute.xlu0 1
  %323 = vperm.xlu0 %322, %v55
  %v324 = vpop.permute.xlu0 %323
  %326 = vset.pattern.permute.xlu0 1
  %327 = vperm.xlu0 %326, %v56
  %v328 = vpop.permute.xlu0 %327
  %330 = vset.pattern.permute.xlu0 1
  %331 = vperm.xlu0 %330, %v57
  %v332 = vpop.permute.xlu0 %331
  %v334 = vlaneseq
  %v335 = vshrl.u32 %v334, 7
  %v336 = vsub.s32 1, %v335
  %v337 = vrot.slane %v41, %v336
  %v338 = vmul.f32 %v272, %v337
  %v339 = vmul.f32 %v276, %v337
  %v340 = vmul.f32 %v280, %v337
  %v341 = vmul.f32 %v284, %v337
  %v342 = vmul.f32 %v288, %v337
  %v343 = vmul.f32 %v292, %v337
  %v344 = vmul.f32 %v296, %v337
  %v345 = vmul.f32 %v300, %v337
  %v346 = vmul.f32 %v304, %v337
  %v347 = vmul.f32 %v308, %v337
  %v348 = vmul.f32 %v312, %v337
  %v349 = vmul.f32 %v316, %v337
  %v350 = vmul.f32 %v320, %v337
  %v351 = vmul.f32 %v324, %v337
  %v352 = vmul.f32 %v328, %v337
  %v353 = vmul.f32 %v332, %v337
  %v354 = vadd.f32 %v254, %v338
  %v355 = vadd.f32 %v255, %v339
  %v356 = vadd.f32 %v256, %v340
  %v357 = vadd.f32 %v257, %v341
  %v358 = vadd.f32 %v258, %v342
  %v359 = vadd.f32 %v259, %v343
  %v360 = vadd.f32 %v260, %v344
  %v361 = vadd.f32 %v261, %v345
  %v362 = vadd.f32 %v262, %v346
  %v363 = vadd.f32 %v263, %v347
  %v364 = vadd.f32 %v264, %v348
  %v365 = vadd.f32 %v265, %v349
  %v366 = vadd.f32 %v266, %v350
  %v367 = vadd.f32 %v267, %v351
  %v368 = vadd.f32 %v268, %v352
  %v369 = vadd.f32 %v269, %v353
  %v370 = vmax.f32 %v354, 0.0
  %v371 = vmax.f32 %v355, 0.0
  %v372 = vmax.f32 %v356, 0.0
  %v373 = vmax.f32 %v357, 0.0
  %v374 = vmax.f32 %v358, 0.0
  %v375 = vmax.f32 %v359, 0.0
  %v376 = vmax.f32 %v360, 0.0
  %v377 = vmax.f32 %v361, 0.0
  %v378 = vmax.f32 %v362, 0.0
  %v379 = vmax.f32 %v363, 0.0
  %v380 = vmax.f32 %v364, 0.0
  %v381 = vmax.f32 %v365, 0.0
  %v382 = vmax.f32 %v366, 0.0
  %v383 = vmax.f32 %v367, 0.0
  %v384 = vmax.f32 %v368, 0.0
  %v385 = vmax.f32 %v369, 0.0
  %v386 = vld [vmem:[%s3] sm:$0xf]
  %v387 = vld [vmem:[%s3 + $0x4] sm:$0xf]
  %v388 = vld [vmem:[%s3 + $0x8] sm:$0xf]
  %v389 = vld [vmem:[%s3 + $0xc] sm:$0xf]
  %v390 = vld [vmem:[%s3 + $0x10] sm:$0xf]
  %v391 = vld [vmem:[%s3 + $0x14] sm:$0xf]
  %v392 = vld [vmem:[%s3 + $0x18] sm:$0xf]
  %v393 = vld [vmem:[%s3 + $0x1c] sm:$0xf]
  %v394 = vpack.c.bf16 %v371, %v370
  %v395 = vpack.c.bf16 %v373, %v372
  %v396 = vpack.c.bf16 %v375, %v374
  %v397 = vpack.c.bf16 %v377, %v376
  %v398 = vpack.c.bf16 %v379, %v378
  %v399 = vpack.c.bf16 %v381, %v380
  %v400 = vpack.c.bf16 %v383, %v382
  %v401 = vpack.c.bf16 %v385, %v384
  %v402 = vld [vmem:[%s4] sm:$0xff]
  %v403 = vld [vmem:[%s4 + $0x8] sm:$0xff]
  %v404 = vld [vmem:[%s4 + $0x10] sm:$0xff]
  %v405 = vld [vmem:[%s4 + $0x18] sm:$0xff]
  %v406 = vld [vmem:[%s4 + $0x20] sm:$0xff]
  %v407 = vld [vmem:[%s4 + $0x28] sm:$0xff]
  %v408 = vld [vmem:[%s4 + $0x30] sm:$0xff]
  %v409 = vld [vmem:[%s4 + $0x38] sm:$0xff]
  %411 = vset.pattern.permute.xlu0 0
  %412 = vperm.xlu0 %411, %v402
  %v413 = vpop.permute.xlu0 %412
  %416 = vset.pattern.permute.xlu0 0
  %417 = vperm.xlu0 %416, %v403
  %v418 = vpop.permute.xlu0 %417
  %421 = vset.pattern.permute.xlu0 0
  %422 = vperm.xlu0 %421, %v404
  %v423 = vpop.permute.xlu0 %422
  %426 = vset.pattern.permute.xlu0 0
  %427 = vperm.xlu0 %426, %v405
  %v428 = vpop.permute.xlu0 %427
  %431 = vset.pattern.permute.xlu0 0
  %432 = vperm.xlu0 %431, %v406
  %v433 = vpop.permute.xlu0 %432
  %436 = vset.pattern.permute.xlu0 0
  %437 = vperm.xlu0 %436, %v407
  %v438 = vpop.permute.xlu0 %437
  %441 = vset.pattern.permute.xlu0 0
  %442 = vperm.xlu0 %441, %v408
  %v443 = vpop.permute.xlu0 %442
  %446 = vset.pattern.permute.xlu0 0
  %447 = vperm.xlu0 %446, %v409
  %v448 = vpop.permute.xlu0 %447
  %v458 = vunpack.c.l.b16 %v386
  %v459 = vunpack.c.l.b16 %v387
  %v460 = vunpack.c.l.b16 %v388
  %v461 = vunpack.c.l.b16 %v389
  %v462 = vunpack.c.l.b16 %v390
  %v463 = vunpack.c.l.b16 %v391
  %v464 = vunpack.c.l.b16 %v392
  %v465 = vunpack.c.l.b16 %v393
  %v466 = vpack.c.b16 %v459, %v458
  %v467 = vpack.c.b16 %v461, %v460
  %v468 = vpack.c.b16 %v463, %v462
  %v469 = vpack.c.b16 %v465, %v464
  %474 = vmatprep.subr.bf16.mxu0 0
  %475 = vmatpush1.bf16.msra.mxu0 %v401
  %476 = vmatprep.subr.bf16.mxu0 0
  %477 = vmatpush1.bf16.msra.mxu0 %v400
  %478 = vmatprep.subr.bf16.mxu0 0
  %479 = vmatpush1.bf16.msra.mxu0 %v399
  %480 = vmatprep.subr.bf16.mxu0 0
  %481 = vmatpush1.bf16.msra.mxu0 %v398
  %482 = vmatprep.subr.bf16.mxu0 0
  %483 = vmatpush1.bf16.msra.mxu0 %v397
  %484 = vmatprep.subr.bf16.mxu0 0
  %485 = vmatpush1.bf16.msra.mxu0 %v396
  %486 = vmatprep.subr.bf16.mxu0 0
  %487 = vmatpush1.bf16.msra.mxu0 %v395
  %488 = vmatprep.subr.bf16.mxu0 0
  %489 = vmatpush1.bf16.msra.mxu0 %v394
  %490 = vmatprep.subr.bf16.mxu0 0
  %491 = vmatpush2.bf16.msra.mxu0 0
  %492 = vmatprep.subr.bf16.mxu0 0
  %493 = vmatpush2.bf16.msra.mxu0 0
  %494 = vmatprep.subr.bf16.mxu0 0
  %495 = vmatpush2.bf16.msra.mxu0 0
  %496 = vmatprep.subr.bf16.mxu0 0
  %497 = vmatpush2.bf16.msra.mxu0 0
  %498 = vmatprep.subr.bf16.mxu0 0
  %499 = vmatpush2.bf16.msra.mxu0 0
  %500 = vmatprep.subr.bf16.mxu0 0
  %501 = vmatpush2.bf16.msra.mxu0 0
  %502 = vmatprep.subr.bf16.mxu0 0
  %503 = vmatpush2.bf16.msra.mxu0 0
  %504 = vmatprep.subr.bf16.mxu0 0
  %505 = vmatpush2.bf16.msra.mxu0 0
  %506 = vmatprep.mubr.bf16.mxu0 0
  %507 = vmatmul.mubr.bf16.gmra.mxu0 %v466
  %v508 = vpop.f32.mrf.mxu0
  %v509 = vadd.f32 %v413, %v508
  %v510 = vpop.f32.mrf.mxu0
  %v511 = vpop.f32.mrf.mxu0
  %v512 = vadd.f32 %v418, %v511
  %v513 = vpop.f32.mrf.mxu0
  %514 = vmatprep.mubr.bf16.mxu0 0
  %515 = vmatmul.mubr.bf16.gmra.mxu0 %v467
  %v516 = vpop.f32.mrf.mxu0
  %v517 = vadd.f32 %v423, %v516
  %v518 = vpop.f32.mrf.mxu0
  %v519 = vpop.f32.mrf.mxu0
  %v520 = vadd.f32 %v428, %v519
  %v521 = vpop.f32.mrf.mxu0
  %522 = vmatprep.mubr.bf16.mxu0 0
  %523 = vmatmul.mubr.bf16.gmra.mxu0 %v468
  %v524 = vpop.f32.mrf.mxu0
  %v525 = vadd.f32 %v433, %v524
  %v526 = vpop.f32.mrf.mxu0
  %v527 = vpop.f32.mrf.mxu0
  %v528 = vadd.f32 %v438, %v527
  %v529 = vpop.f32.mrf.mxu0
  %530 = vmatprep.mubr.bf16.mxu0 0
  %531 = vmatmul.mubr.bf16.gmra.mxu0 %v469
  %v532 = vpop.f32.mrf.mxu0
  %v533 = vadd.f32 %v443, %v532
  %v534 = vpop.f32.mrf.mxu0
  %v535 = vpop.f32.mrf.mxu0
  %v536 = vadd.f32 %v448, %v535
  %v537 = vpop.f32.mrf.mxu0
  %538 = vdwg.mxu0
  %v539 = vmax.f32 %v509, 0.0
  %v540 = vmax.f32 %v512, 0.0
  %v541 = vmax.f32 %v517, 0.0
  %v542 = vmax.f32 %v520, 0.0
  %v543 = vmax.f32 %v525, 0.0
  %v544 = vmax.f32 %v528, 0.0
  %v545 = vmax.f32 %v533, 0.0
  %v546 = vmax.f32 %v536, 0.0
  %v547 = vld [vmem:[%s5] sm:$0xf]
  %v548 = vld [vmem:[%s5 + $0x4] sm:$0xf]
  %v549 = vld [vmem:[%s5 + $0x8] sm:$0xf]
  %v550 = vld [vmem:[%s5 + $0xc] sm:$0xf]
  %v551 = vpack.c.bf16 %v540, %v539
  %v552 = vpack.c.bf16 %v542, %v541
  %v553 = vpack.c.bf16 %v544, %v543
  %v554 = vpack.c.bf16 %v546, %v545
  %v555 = vld [vmem:[%s6] sm:$0xff]
  %v556 = vld [vmem:[%s6 + $0x8] sm:$0xff]
  %v557 = vld [vmem:[%s6 + $0x10] sm:$0xff]
  %v558 = vld [vmem:[%s6 + $0x18] sm:$0xff]
  %560 = vset.pattern.permute.xlu0 0
  %561 = vperm.xlu0 %560, %v555
  %v562 = vpop.permute.xlu0 %561
  %565 = vset.pattern.permute.xlu0 0
  %566 = vperm.xlu0 %565, %v556
  %v567 = vpop.permute.xlu0 %566
  %570 = vset.pattern.permute.xlu0 0
  %571 = vperm.xlu0 %570, %v557
  %v572 = vpop.permute.xlu0 %571
  %575 = vset.pattern.permute.xlu0 0
  %576 = vperm.xlu0 %575, %v558
  %v577 = vpop.permute.xlu0 %576
  %v583 = vunpack.c.l.b16 %v547
  %v584 = vunpack.c.l.b16 %v548
  %v585 = vunpack.c.l.b16 %v549
  %v586 = vunpack.c.l.b16 %v550
  %v587 = vpack.c.b16 %v584, %v583
  %v588 = vpack.c.b16 %v586, %v585
  %vm589 = vcmask 523264
  %v591 = vsel %vm589, %v587, 0
  %v594 = vsel %vm589, %v588, 0
  %596 = vmatprep.subr.bf16.mxu0 0
  %597 = vmatpush1.bf16.msra.mxu0 0
  %598 = vmatprep.subr.bf16.mxu0 0
  %599 = vmatpush1.bf16.msra.mxu0 0
  %600 = vmatprep.subr.bf16.mxu0 0
  %601 = vmatpush1.bf16.msra.mxu0 0
  %602 = vmatprep.subr.bf16.mxu0 0
  %603 = vmatpush1.bf16.msra.mxu0 0
  %604 = vmatprep.subr.bf16.mxu0 0
  %605 = vmatpush1.bf16.msra.mxu0 %v554
  %606 = vmatprep.subr.bf16.mxu0 0
  %607 = vmatpush1.bf16.msra.mxu0 %v553
  %608 = vmatprep.subr.bf16.mxu0 0
  %609 = vmatpush1.bf16.msra.mxu0 %v552
  %610 = vmatprep.subr.bf16.mxu0 0
  %611 = vmatpush1.bf16.msra.mxu0 %v551
  %612 = vmatprep.subr.bf16.mxu0 0
  %613 = vmatpush2.bf16.msra.mxu0 0
  %614 = vmatprep.subr.bf16.mxu0 0
  %615 = vmatpush2.bf16.msra.mxu0 0
  %616 = vmatprep.subr.bf16.mxu0 0
  %617 = vmatpush2.bf16.msra.mxu0 0
  %618 = vmatprep.subr.bf16.mxu0 0
  %619 = vmatpush2.bf16.msra.mxu0 0
  %620 = vmatprep.subr.bf16.mxu0 0
  %621 = vmatpush2.bf16.msra.mxu0 0
  %622 = vmatprep.subr.bf16.mxu0 0
  %623 = vmatpush2.bf16.msra.mxu0 0
  %624 = vmatprep.subr.bf16.mxu0 0
  %625 = vmatpush2.bf16.msra.mxu0 0
  %626 = vmatprep.subr.bf16.mxu0 0
  %627 = vmatpush2.bf16.msra.mxu0 0
  %628 = vmatprep.mubr.bf16.mxu0 0
  %629 = vmatmul.mubr.bf16.gmra.mxu0 %v591
  %v630 = vpop.f32.mrf.mxu0
  %v631 = vadd.f32 %v562, %v630
  %v632 = vpop.f32.mrf.mxu0
  %v633 = vpop.f32.mrf.mxu0
  %v634 = vadd.f32 %v567, %v633
  %v635 = vpop.f32.mrf.mxu0
  %636 = vmatprep.mubr.bf16.mxu0 0
  %637 = vmatmul.mubr.bf16.gmra.mxu0 %v594
  %v638 = vpop.f32.mrf.mxu0
  %v639 = vadd.f32 %v572, %v638
  %v640 = vpop.f32.mrf.mxu0
  %v641 = vpop.f32.mrf.mxu0
  %v642 = vadd.f32 %v577, %v641
  %v643 = vpop.f32.mrf.mxu0
  %644 = vdwg.mxu0
  %v645 = vmax.f32 %v631, 0.0
  %v646 = vmax.f32 %v634, 0.0
  %v647 = vmax.f32 %v639, 0.0
  %v648 = vmax.f32 %v642, 0.0
  %v649 = vld [vmem:[%s7] sm:$0xf]
  %v650 = vld [vmem:[%s7 + $0x4] sm:$0xf]
  %v651 = vpack.c.bf16 %v646, %v645
  %v652 = vpack.c.bf16 %v648, %v647
  %v653 = vld [vmem:[%s8] sm:$0xff]
  %v654 = vld [vmem:[%s8 + $0x8] sm:$0xff]
  %656 = vset.pattern.permute.xlu0 0
  %657 = vperm.xlu0 %656, %v653
  %v658 = vpop.permute.xlu0 %657
  %661 = vset.pattern.permute.xlu0 0
  %662 = vperm.xlu0 %661, %v654
  %v663 = vpop.permute.xlu0 %662
  %v667 = vunpack.c.l.b16 %v649
  %v668 = vunpack.c.l.b16 %v650
  %v669 = vpack.c.b16 %v668, %v667
  %vm670 = vcmask 261120
  %v672 = vsel %vm670, %v669, 0
  %674 = vmatprep.subr.bf16.mxu0 0
  %675 = vmatpush1.bf16.msra.mxu0 0
  %676 = vmatprep.subr.bf16.mxu0 0
  %677 = vmatpush1.bf16.msra.mxu0 0
  %678 = vmatprep.subr.bf16.mxu0 0
  %679 = vmatpush1.bf16.msra.mxu0 0
  %680 = vmatprep.subr.bf16.mxu0 0
  %681 = vmatpush1.bf16.msra.mxu0 0
  %682 = vmatprep.subr.bf16.mxu0 0
  %683 = vmatpush1.bf16.msra.mxu0 0
  %684 = vmatprep.subr.bf16.mxu0 0
  %685 = vmatpush1.bf16.msra.mxu0 0
  %686 = vmatprep.subr.bf16.mxu0 0
  %687 = vmatpush1.bf16.msra.mxu0 %v652
  %688 = vmatprep.subr.bf16.mxu0 0
  %689 = vmatpush1.bf16.msra.mxu0 %v651
  %690 = vmatprep.subr.bf16.mxu0 0
  %691 = vmatpush2.bf16.msra.mxu0 0
  %692 = vmatprep.subr.bf16.mxu0 0
  %693 = vmatpush2.bf16.msra.mxu0 0
  %694 = vmatprep.subr.bf16.mxu0 0
  %695 = vmatpush2.bf16.msra.mxu0 0
  %696 = vmatprep.subr.bf16.mxu0 0
  %697 = vmatpush2.bf16.msra.mxu0 0
  %698 = vmatprep.subr.bf16.mxu0 0
  %699 = vmatpush2.bf16.msra.mxu0 0
  %700 = vmatprep.subr.bf16.mxu0 0
  %701 = vmatpush2.bf16.msra.mxu0 0
  %702 = vmatprep.subr.bf16.mxu0 0
  %703 = vmatpush2.bf16.msra.mxu0 0
  %704 = vmatprep.subr.bf16.mxu0 0
  %705 = vmatpush2.bf16.msra.mxu0 0
  %706 = vmatprep.mubr.bf16.mxu0 0
  %707 = vmatmul.mubr.bf16.gmra.mxu0 %v672
  %v708 = vpop.f32.mrf.mxu0
  %v709 = vadd.f32 %v658, %v708
  %v710 = vpop.f32.mrf.mxu0
  %v711 = vpop.f32.mrf.mxu0
  %v712 = vadd.f32 %v663, %v711
  %v713 = vpop.f32.mrf.mxu0
  %714 = vdwg.mxu0
  %v715 = vmax.f32 %v709, 0.0
  %v716 = vmax.f32 %v712, 0.0
  %v717 = vld [vmem:[%s9] sm:$0x1]
  %v718 = vpack.c.bf16 %v716, %v715
  %v719 = vld [vmem:[#allocation2] sm:$0x1]
  %721 = vset.pattern.permute.xlu0 0
  %722 = vperm.xlu0 %721, %v719
  %v723 = vpop.permute.xlu0 %722
  %v725 = vlaneseq
  %v726 = vshrl.u32 %v725, 7
  %v727 = vsub.s32 0, %v726
  %v728 = vrot.slane %v723, %v727
  %vm729 = vcmask 130048
  %v731 = vsel %vm729, %v717, 0
  %733 = vmatprep.subr.bf16.mxu0 0
  %734 = vmatpush1.bf16.msra.mxu0 0
  %735 = vmatprep.subr.bf16.mxu0 0
  %736 = vmatpush1.bf16.msra.mxu0 0
  %737 = vmatprep.subr.bf16.mxu0 0
  %738 = vmatpush1.bf16.msra.mxu0 0
  %739 = vmatprep.subr.bf16.mxu0 0
  %740 = vmatpush1.bf16.msra.mxu0 0
  %741 = vmatprep.subr.bf16.mxu0 0
  %742 = vmatpush1.bf16.msra.mxu0 0
  %743 = vmatprep.subr.bf16.mxu0 0
  %744 = vmatpush1.bf16.msra.mxu0 0
  %745 = vmatprep.subr.bf16.mxu0 0
  %746 = vmatpush1.bf16.msra.mxu0 0
  %747 = vmatprep.subr.bf16.mxu0 0
  %748 = vmatpush1.bf16.msra.mxu0 %v718
  %749 = vmatprep.subr.bf16.mxu0 0
  %750 = vmatpush2.bf16.msra.mxu0 0
  %751 = vmatprep.subr.bf16.mxu0 0
  %752 = vmatpush2.bf16.msra.mxu0 0
  %753 = vmatprep.subr.bf16.mxu0 0
  %754 = vmatpush2.bf16.msra.mxu0 0
  %755 = vmatprep.subr.bf16.mxu0 0
  %756 = vmatpush2.bf16.msra.mxu0 0
  %757 = vmatprep.subr.bf16.mxu0 0
  %758 = vmatpush2.bf16.msra.mxu0 0
  %759 = vmatprep.subr.bf16.mxu0 0
  %760 = vmatpush2.bf16.msra.mxu0 0
  %761 = vmatprep.subr.bf16.mxu0 0
  %762 = vmatpush2.bf16.msra.mxu0 0
  %763 = vmatprep.subr.bf16.mxu0 0
  %764 = vmatpush2.bf16.msra.mxu0 0
  %765 = vmatprep.mubr.bf16.mxu0 0
  %766 = vmatmul.mubr.bf16.gmra.mxu0 %v731
  %v767 = vpop.f32.mrf.mxu0
  %v768 = vadd.f32 %v728, %v767
  %v769 = vpop.f32.mrf.mxu0
  %v770 = vpop.f32.mrf.mxu0
  %v771 = vpop.f32.mrf.mxu0
  %772 = vdwg.mxu0
  %773 = vst [vmem:[%s11] sm:$0x1] %v768
  // Predicated region
  $region46: #{snet_forward.1} parent=0 // pred_check
    _
  $region47: #{snet_forward.1} parent=0 // pred_check_branch
    %775 = sbr.rel (0) target = $region49
  $region48: #{snet_forward.1} parent=0 // pred_region
    _
  $region49: #{snet_forward.1} parent=0 // pred_fallthru
    _
  // Predicated region
  $region50: #{snet_forward.1} parent=0 // pred_check
    _
  $region51: #{snet_forward.1} parent=0 // pred_check_branch
    %777 = sbr.rel (0) target = $region53
  $region52: #{snet_forward.1} parent=0 // pred_region
    _
  $region53: #{snet_forward.1} parent=0 // pred_fallthru
    _

</llo_original>
